<compile_context>
chip_gen: v7x
topology: tpu7x:2x2x1
jax: 0.10.0
libtpu: 0.0.40
codegen_flags: <defaults>
</compile_context>

<pallas_src>
import jax
import jax.numpy as jnp
from jax.experimental import pallas as pl
from jax.experimental.pallas import tpu as pltpu


def _round_up(x, m):
    return (x + m - 1) // m * m


# ---------------------------------------------------------------------------
# Kernels
# ---------------------------------------------------------------------------
def _make_resident_kernel(n_codebooks, v_p, n_rep, compute_dtype):
    """Resident-table path: grid = (batch, seq_tiles); table DMA'd once."""

    def kernel(codes_ref, table_ref, out_ref):
        # codes_ref : (tS, C)            int32
        # table_ref : (C, n_rep*Vp, D)   compute_dtype  (VMEM-resident)
        # out_ref   : (tS, D)            out dtype
        t_s = codes_ref.shape[0]
        codes = codes_ref[...]
        iota_v = jax.lax.broadcasted_iota(jnp.int32, (t_s, v_p), 1)
        acc = jnp.zeros(out_ref.shape, jnp.float32)
        for c in range(n_codebooks):                       # static unroll, C is small
            # Exact 0/1 selection == gather of (padded) table rows.
            onehot = (iota_v == codes[:, c:c + 1]).astype(compute_dtype)  # (tS, Vp)
            if n_rep > 1:
                # hi/lo-split tables share the same one-hot: one matmul of
                # K = n_rep*Vp accumulates hi + lo in f32.
                onehot = jnp.concatenate([onehot] * n_rep, axis=1)
            acc = acc + jnp.dot(onehot, table_ref[c],
                                preferred_element_type=jnp.float32)
        out_ref[...] = acc.astype(out_ref.dtype)

    return kernel


def _make_stream_kernel(v_p, n_rep, compute_dtype):
    """Streamed-table fallback: grid = (batch, seq_tiles, codebook)."""

    def kernel(codes_ref, table_ref, out_ref, acc_ref):
        # codes_ref : (tS, 1)          int32  -- this codebook's codes
        # table_ref : (n_rep*Vp, D)    compute_dtype -- this codebook's slice
        # out_ref   : (tS, D)          out dtype
        # acc_ref   : (tS, D) f32 VMEM scratch, resident across the codebook axis
        c = pl.program_id(2)

        @pl.when(c == 0)
        def _init():
            acc_ref[...] = jnp.zeros_like(acc_ref)

        t_s = codes_ref.shape[0]
        iota_v = jax.lax.broadcasted_iota(jnp.int32, (t_s, v_p), 1)
        onehot = (iota_v == codes_ref[...]).astype(compute_dtype)         # (tS, Vp)
        if n_rep > 1:
            onehot = jnp.concatenate([onehot] * n_rep, axis=1)
        acc_ref[...] += jnp.dot(onehot, table_ref[...],
                                preferred_element_type=jnp.float32)

        @pl.when(c == pl.num_programs(2) - 1)
        def _emit():
            out_ref[...] = acc_ref[...].astype(out_ref.dtype)

    return kernel


# ---------------------------------------------------------------------------
# Wrapper
# ---------------------------------------------------------------------------
def codebook_embedding(codes, emb_tables, *, precision="bf16_hilo",
                       out_dtype=jnp.float32, seq_tile_target=512,
                       force_stream=False):
    """Pallas forward of VerySimpleCodebookEmbedding.

    codes      : (B, C, S) int, values in [0, vocab_size] (includes mask slot)
    emb_tables : (C, vocab_size + 1, d_model) float (stacked nn.Embedding weights)
    precision  : "bf16_hilo" (default, near-f32 accuracy on bf16 MXU),
                 "bf16" (fastest, ~1e-3 rel err), or "f32" (exact).
    returns    : (B, S, d_model) in out_dtype (f32 default, matching the module)
    """
    B, C, S = codes.shape
    C2, V1, D = emb_tables.shape
    assert C2 == C, "codes / embedding-table codebook count mismatch"

    # --- vocab padding only (lane-dense one-hot, MXU-aligned K); no D padding.
    # Padded rows are zero and unselectable (codes <= vocab_size < V1).
    v_p = _round_up(V1, 128)
    tbl_f32 = jnp.pad(emb_tables.astype(jnp.float32),
                      ((0, 0), (0, v_p - V1), (0, 0)))

    if precision == "f32":
        tables = tbl_f32
        compute_dtype = jnp.float32
        n_rep = 1
    elif precision == "bf16":
        tables = tbl_f32.astype(jnp.bfloat16)
        compute_dtype = jnp.bfloat16
        n_rep = 1
    elif precision == "bf16_hilo":
        hi = tbl_f32.astype(jnp.bfloat16)
        lo = (tbl_f32 - hi.astype(jnp.float32)).astype(jnp.bfloat16)
        tables = jnp.concatenate([hi, lo], axis=1)          # (C, 2*Vp, D)
        compute_dtype = jnp.bfloat16
        n_rep = 2
    else:
        raise ValueError(f"unknown precision: {precision}")
    k_dim = n_rep * v_p

    # --- sequence tiling: pad S to a tile multiple instead of unbounded tiles.
    if S <= seq_tile_target:
        t_s = _round_up(S, 8)
    else:
        t_s = max(128, (seq_tile_target // 128) * 128)
    s_pad = _round_up(S, t_s)
    n_s = s_pad // t_s

    codes = codes.astype(jnp.int32)
    if s_pad != S:
        codes = jnp.pad(codes, ((0, 0), (0, 0), (0, s_pad - S)))  # code 0 is valid

    # --- per-chip VMEM budget (leave headroom: ~48 MiB on v7x, ~100 MiB on
    # the 128 MiB v5e/v6e parts).
    try:
        phys_vmem = int(pltpu.get_tpu_info().vmem_capacity_bytes)
    except Exception:
        phys_vmem = 64 << 20                                # conservative default
    vmem_cap = max(16 << 20, min(phys_vmem - (16 << 20), int(phys_vmem * 0.8)))

    t_item = jnp.dtype(tables.dtype).itemsize
    o_item = jnp.dtype(out_dtype).itemsize
    c_item = jnp.dtype(compute_dtype).itemsize
    table_bytes = C * k_dim * D * t_item
    common = (2 * t_s * D * o_item          # double-buffered output block
              + t_s * k_dim * c_item        # one-hot temporary
              + t_s * D * 4                 # f32 accumulator
              + (4 << 20))                  # headroom for Mosaic scratch
    resident_est = 2 * table_bytes + 2 * t_s * C * 4 + common
    stream_est = 2 * (table_bytes // C) + 2 * t_s * 4 + t_s * D * 4 + common

    use_resident = (not force_stream) and resident_est <= vmem_cap
    # TODO(synk): if a single per-codebook slice alone exceeds vmem_cap, add
    # vocab/d_model tiling of the table (not needed for typical codebook sizes).

    if use_resident:
        # Codes as one lane-denser (tS, C) block per tile; table as a single
        # constant-index block -> fetched once, resident for the whole grid.
        codes_2d = jnp.transpose(codes, (0, 2, 1))          # (B, S_pad, C)
        kernel = _make_resident_kernel(C, v_p, n_rep, compute_dtype)
        grid = (B, n_s)
        grid_spec = pltpu.PrefetchScalarGridSpec(
            num_scalar_prefetch=0,
            grid=grid,
            in_specs=[
                pl.BlockSpec((pl.Squeezed(), t_s, C), lambda b, s: (b, s, 0)),
                pl.BlockSpec((C, k_dim, D), lambda b, s: (0, 0, 0)),
            ],
            out_specs=pl.BlockSpec((pl.Squeezed(), t_s, D),
                                   lambda b, s: (b, s, 0)),
        )
        dim_sem = ("parallel", "parallel")                  # megacore on v7x
        vmem_limit = int(min(max(resident_est, 16 << 20), vmem_cap))
        bytes_accessed = codes_2d.size * 4 + table_bytes + B * s_pad * D * o_item
        args = (codes_2d, tables)
    else:
        # Streamed fallback: one per-codebook table slice per step
        # (double-buffered), codebook axis innermost / "arbitrary".
        codes_col = codes.reshape(B * C, s_pad)[..., None]  # (B*C, S_pad, 1)
        kernel = _make_stream_kernel(v_p, n_rep, compute_dtype)
        grid = (B, n_s, C)
        grid_spec = pltpu.PrefetchScalarGridSpec(
            num_scalar_prefetch=0,
            grid=grid,
            in_specs=[
                pl.BlockSpec((pl.Squeezed(), t_s, 1),
                             lambda b, s, c: (b * C + c, s, 0)),
                pl.BlockSpec((pl.Squeezed(), k_dim, D),
                             lambda b, s, c: (c, 0, 0)),
            ],
            out_specs=pl.BlockSpec((pl.Squeezed(), t_s, D),
                                   lambda b, s, c: (b, s, 0)),
            scratch_shapes=[pltpu.VMEM((t_s, D), jnp.float32)],
        )
        dim_sem = ("parallel", "parallel", "arbitrary")
        vmem_limit = int(min(max(stream_est, 16 << 20), vmem_cap))
        n_steps = B * n_s * C
        bytes_accessed = (B * C * s_pad * 4 + n_steps * (table_bytes // C)
                          + B * s_pad * D * o_item)
        args = (codes_col, tables)

    cost = pl.CostEstimate(
        flops=2 * B * s_pad * C * k_dim * D,
        transcendentals=0,
        bytes_accessed=int(bytes_accessed),
    )

    out_padded = pl.pallas_call(
        kernel,
        out_shape=jax.ShapeDtypeStruct((B, s_pad, D), out_dtype),
        grid_spec=grid_spec,
        compiler_params=pltpu.CompilerParams(
            dimension_semantics=dim_sem,
            vmem_limit_bytes=vmem_limit),
        cost_estimate=cost,
    )(*args)

    if s_pad != S:
        out_padded = out_padded[:, :S, :]
    return out_padded


def reference_forward(codes, emb_tables):
    """Pure-JAX mirror of the PyTorch forward for verification."""
    B, C, S = codes.shape
    out = jnp.zeros((B, S, emb_tables.shape[-1]), jnp.float32)
    for i in range(C):
        out = out + emb_tables[i][codes[:, i, :]]
    return out


if __name__ == "__main__":
    # Small shapes consistent with the module.
    n_codebooks = 4
    vocab_size = 32          # each table has vocab_size + 1 rows (mask slot)
    d_model = 32
    batch_size = 2
    seq_len = 8

    key = jax.random.PRNGKey(0)
    k_emb, k_codes = jax.random.split(key)

    emb_tables = jax.random.normal(
        k_emb, (n_codebooks, vocab_size + 1, d_model), dtype=jnp.float32)
    codes = jax.random.randint(
        k_codes, (batch_size, n_codebooks, seq_len), 0, vocab_size + 1,
        dtype=jnp.int32)

    ref = reference_forward(codes, emb_tables)

    # 1) Default path: resident table, bf16 hi/lo split (near-f32 accuracy).
    out = jax.block_until_ready(codebook_embedding(codes, emb_tables))
    assert out.shape == (batch_size, seq_len, d_model)
    assert jnp.allclose(out, ref, rtol=2e-3, atol=2e-3), \
        f"hilo max abs err {jnp.max(jnp.abs(out - ref))}"

    # 2) Exact f32 path (resident table, f32 MXU).
    out_f32 = jax.block_until_ready(
        codebook_embedding(codes, emb_tables, precision="f32"))
    assert jnp.allclose(out_f32, ref, rtol=1e-6, atol=1e-5), \
        f"f32 max abs err {jnp.max(jnp.abs(out_f32 - ref))}"

    # 3) Streaming fallback path (used when the stacked table exceeds VMEM).
    out_stream = jax.block_until_ready(
        codebook_embedding(codes, emb_tables, force_stream=True))
    assert jnp.allclose(out_stream, ref, rtol=2e-3, atol=2e-3), \
        f"stream max abs err {jnp.max(jnp.abs(out_stream - ref))}"

    print("KERNEL_OK")
</pallas_src>

<mosaic_0001>
module attributes {stable_mosaic.version = 11 : i64} {
  func.func @kernel(%arg0: i32, %arg1: i32, %arg2: memref<1x8x4xi32, #tpu.memory_space<vmem>>, %arg3: memref<4x256x32xbf16, #tpu.memory_space<vmem>>, %arg4: memref<1x8x32xf32, #tpu.memory_space<vmem>>) attributes {dimension_semantics = [#tpu.dimension_semantics<parallel>, #tpu.dimension_semantics<parallel>], iteration_bounds = array<i64: 2, 1>, scalar_prefetch = 0 : i64, scratch_operands = 0 : i64, tpu.core_type = #tpu.core_type<tc>, window_params = [{transform_indices = @transform_0, window_bounds = array<i64: 1, 8, 4>}, {pipeline_mode = #tpu.pipeline_mode<synchronous>, transform_indices = @transform_1, window_bounds = array<i64: 4, 256, 32>}, {transform_indices = @transform_2, window_bounds = array<i64: 1, 8, 32>}]} {
    %c0 = arith.constant 0 : index
    %c0_0 = arith.constant 0 : index
    %c0_1 = arith.constant 0 : index
    %0 = vector.load %arg2[%c0, %c0_0, %c0_1] : memref<1x8x4xi32, #tpu.memory_space<vmem>>, vector<1x8x4xi32>
    %1 = vector.shape_cast %0 : vector<1x8x4xi32> to vector<8x4xi32>
    %2 = tpu.iota {dimensions = array<i32: 1>} : vector<8x128xi32>
    %cst = arith.constant 0.000000e+00 : f32
    %3 = vector.broadcast %cst : f32 to vector<8x32xf32>
    %4 = vector.extract_strided_slice %1 {offsets = [0, 0], sizes = [8, 1], strides = [1, 1]} : vector<8x4xi32> to vector<8x1xi32>
    %5 = vector.broadcast %4 : vector<8x1xi32> to vector<8x128xi32>
    %6 = arith.cmpi eq, %2, %5 : vector<8x128xi32>
    %7 = arith.extui %6 : vector<8x128xi1> to vector<8x128xi32>
    %8 = arith.sitofp %7 : vector<8x128xi32> to vector<8x128xf32>
    %9 = arith.truncf %8 : vector<8x128xf32> to vector<8x128xbf16>
    %10 = tpu.concatenate %9, %9 in 1 : vector<8x128xbf16>, vector<8x128xbf16> -> vector<8x256xbf16>
    %c0_2 = arith.constant 0 : index
    %c0_3 = arith.constant 0 : index
    %c0_4 = arith.constant 0 : index
    %11 = vector.load %arg3[%c0_2, %c0_3, %c0_4] : memref<4x256x32xbf16, #tpu.memory_space<vmem>>, vector<1x256x32xbf16>
    %12 = vector.shape_cast %11 : vector<1x256x32xbf16> to vector<256x32xbf16>
    %cst_5 = arith.constant dense<0.000000e+00> : vector<8x32xf32>
    %13 = tpu.matmul %10, %12, %cst_5 {dimension_numbers = #tpu.dot_dimension_numbers<[1], [0], [0], [1], [0, 0, 1, 1], [], []>} : vector<8x256xbf16>, vector<256x32xbf16>, vector<8x32xf32> -> vector<8x32xf32>
    %14 = arith.addf %3, %13 : vector<8x32xf32>
    %15 = vector.extract_strided_slice %1 {offsets = [0, 1], sizes = [8, 1], strides = [1, 1]} : vector<8x4xi32> to vector<8x1xi32>
    %16 = vector.broadcast %15 : vector<8x1xi32> to vector<8x128xi32>
    %17 = arith.cmpi eq, %2, %16 : vector<8x128xi32>
    %18 = arith.extui %17 : vector<8x128xi1> to vector<8x128xi32>
    %19 = arith.sitofp %18 : vector<8x128xi32> to vector<8x128xf32>
    %20 = arith.truncf %19 : vector<8x128xf32> to vector<8x128xbf16>
    %21 = tpu.concatenate %20, %20 in 1 : vector<8x128xbf16>, vector<8x128xbf16> -> vector<8x256xbf16>
    %c1 = arith.constant 1 : index
    %c0_6 = arith.constant 0 : index
    %c0_7 = arith.constant 0 : index
    %22 = vector.load %arg3[%c1, %c0_6, %c0_7] : memref<4x256x32xbf16, #tpu.memory_space<vmem>>, vector<1x256x32xbf16>
    %23 = vector.shape_cast %22 : vector<1x256x32xbf16> to vector<256x32xbf16>
    %cst_8 = arith.constant dense<0.000000e+00> : vector<8x32xf32>
    %24 = tpu.matmul %21, %23, %cst_8 {dimension_numbers = #tpu.dot_dimension_numbers<[1], [0], [0], [1], [0, 0, 1, 1], [], []>} : vector<8x256xbf16>, vector<256x32xbf16>, vector<8x32xf32> -> vector<8x32xf32>
    %25 = arith.addf %14, %24 : vector<8x32xf32>
    %26 = vector.extract_strided_slice %1 {offsets = [0, 2], sizes = [8, 1], strides = [1, 1]} : vector<8x4xi32> to vector<8x1xi32>
    %27 = vector.broadcast %26 : vector<8x1xi32> to vector<8x128xi32>
    %28 = arith.cmpi eq, %2, %27 : vector<8x128xi32>
    %29 = arith.extui %28 : vector<8x128xi1> to vector<8x128xi32>
    %30 = arith.sitofp %29 : vector<8x128xi32> to vector<8x128xf32>
    %31 = arith.truncf %30 : vector<8x128xf32> to vector<8x128xbf16>
    %32 = tpu.concatenate %31, %31 in 1 : vector<8x128xbf16>, vector<8x128xbf16> -> vector<8x256xbf16>
    %c2 = arith.constant 2 : index
    %c0_9 = arith.constant 0 : index
    %c0_10 = arith.constant 0 : index
    %33 = vector.load %arg3[%c2, %c0_9, %c0_10] : memref<4x256x32xbf16, #tpu.memory_space<vmem>>, vector<1x256x32xbf16>
    %34 = vector.shape_cast %33 : vector<1x256x32xbf16> to vector<256x32xbf16>
    %cst_11 = arith.constant dense<0.000000e+00> : vector<8x32xf32>
    %35 = tpu.matmul %32, %34, %cst_11 {dimension_numbers = #tpu.dot_dimension_numbers<[1], [0], [0], [1], [0, 0, 1, 1], [], []>} : vector<8x256xbf16>, vector<256x32xbf16>, vector<8x32xf32> -> vector<8x32xf32>
    %36 = arith.addf %25, %35 : vector<8x32xf32>
    %37 = vector.extract_strided_slice %1 {offsets = [0, 3], sizes = [8, 1], strides = [1, 1]} : vector<8x4xi32> to vector<8x1xi32>
    %38 = vector.broadcast %37 : vector<8x1xi32> to vector<8x128xi32>
    %39 = arith.cmpi eq, %2, %38 : vector<8x128xi32>
    %40 = arith.extui %39 : vector<8x128xi1> to vector<8x128xi32>
    %41 = arith.sitofp %40 : vector<8x128xi32> to vector<8x128xf32>
    %42 = arith.truncf %41 : vector<8x128xf32> to vector<8x128xbf16>
    %43 = tpu.concatenate %42, %42 in 1 : vector<8x128xbf16>, vector<8x128xbf16> -> vector<8x256xbf16>
    %c3 = arith.constant 3 : index
    %c0_12 = arith.constant 0 : index
    %c0_13 = arith.constant 0 : index
    %44 = vector.load %arg3[%c3, %c0_12, %c0_13] : memref<4x256x32xbf16, #tpu.memory_space<vmem>>, vector<1x256x32xbf16>
    %45 = vector.shape_cast %44 : vector<1x256x32xbf16> to vector<256x32xbf16>
    %cst_14 = arith.constant dense<0.000000e+00> : vector<8x32xf32>
    %46 = tpu.matmul %43, %45, %cst_14 {dimension_numbers = #tpu.dot_dimension_numbers<[1], [0], [0], [1], [0, 0, 1, 1], [], []>} : vector<8x256xbf16>, vector<256x32xbf16>, vector<8x32xf32> -> vector<8x32xf32>
    %47 = arith.addf %36, %46 : vector<8x32xf32>
    %c0_15 = arith.constant 0 : index
    %c0_16 = arith.constant 0 : index
    %c0_17 = arith.constant 0 : index
    %48 = vector.load %arg4[%c0_15, %c0_16, %c0_17] : memref<1x8x32xf32, #tpu.memory_space<vmem>>, vector<1x8x32xf32>
    %49 = vector.shape_cast %48 : vector<1x8x32xf32> to vector<8x32xf32>
    %50 = vector.shape_cast %47 : vector<8x32xf32> to vector<1x8x32xf32>
    tpu.vector_store %arg4[%c0_15, %c0_16, %c0_17], %50 {strides = array<i32>} : memref<1x8x32xf32, #tpu.memory_space<vmem>>, vector<1x8x32xf32>,
    return
  }
  func.func @transform_0(%arg0: i32, %arg1: i32) -> (i32, i32, i32) {
    %c0_i32 = arith.constant 0 : i32
    %c0_i32_0 = arith.constant 0 : i32
    return %arg0, %arg1, %c0_i32 : i32, i32, i32
  }
  func.func @transform_1(%arg0: i32, %arg1: i32) -> (i32, i32, i32) {
    %c0_i32 = arith.constant 0 : i32
    %c0_i32_0 = arith.constant 0 : i32
    %c0_i32_1 = arith.constant 0 : i32
    %c0_i32_2 = arith.constant 0 : i32
    return %c0_i32, %c0_i32_0, %c0_i32_1 : i32, i32, i32
  }
  func.func @transform_2(%arg0: i32, %arg1: i32) -> (i32, i32, i32) {
    %c0_i32 = arith.constant 0 : i32
    %c0_i32_0 = arith.constant 0 : i32
    return %arg0, %arg1, %c0_i32 : i32, i32, i32
  }
}

</mosaic_0001>

<llo_original>
// kernel: tpu_custom_call.1
$region0: #{tpu_custom_call.1}
  #allocation0 [shape = 'u32[]', space=smem, size = 0x4, offset = 0x4, fixed_abs, tag = 'smem constant byte address 0x4 - core index']
  #allocation1 [shape = 'u32[144,128]{1,0:T(1,128)}', space=vmem, size = 0x12000, scoped, tag = 'internal scratch']
  %s0 = inlined_call_operand.vmem [shape: s32[2,8,4], index: 0, kind: input, shape index: {}]
  %s1 = inlined_call_operand.vmem [shape: bf16[4,256,32], index: 1, kind: input, shape index: {}]
  %s2 = inlined_call_operand.hbm [shape: f32[2,8,32], index: 2, kind: output, shape index: {}]
  %s3 = sld [smem:[#allocation0]]
  $region41: #{tpu_custom_call.1} parent=0
    _
  %s5 = ssub.s32 1, %s3
  %s6 = scalar_select 0, %s5, %s3
  $region1: #{tpu_custom_call.1} parent=0
    #allocation2 [shape = 'u8[8192]{0}', space=vmem, size = 0x2000, scoped, tag = 'output window, operand 0']
    #allocation3 [shape = 's32[2]{0}', space=sflag, size = 0x8, scoped, tag = 'scoped memory for tpu_custom_call.1']
    %7 = vsyncpa [#allocation3], 0
    %s8 = scalar_lea.sflag [#allocation3], 1
    %9 = vsyncpa %s8, 0
    loop: start=0, step=1, limit=4
    $region2: #{tpu_custom_call.1} parent=1 // loop_pre_header
      _
    $region3: #{tpu_custom_call.1} parent=1 // loop_header
      %s11 = sphi 0, %s15
      %p12 = scmp.ge.s32.totalorder %s11, 4
      %s18 = sphi 0, %s30
      %s19 = sphi 0, %s26
      %s20 = sphi 0, %s18
      %s21 = sphi 0, %s19
      %s22 = sphi 0, %s20
      %s23 = sphi 0, %s21
      %s35 = sphi 0, %s37
      %s38 = sphi 0, %s35
      %s39 = sphi 0, %s38
      %s55 = sphi 0, %s39
      %s59 = sphi 0, %s59
      %s61 = sphi 0, %s59
      %s62 = sphi 0, %s61
      %s76 = sphi 0, %s62
      %s84 = sphi 0, %s86
      %s87 = sphi 0, %s84
      %s88 = sphi 0, %s87
      %s104 = sphi 0, %s88
    $region4: #{tpu_custom_call.1} parent=1 // loop_header_branch
      %14 = sbr.rel (%p12) target = $region8
    $region5: #{tpu_custom_call.1} parent=1 // loop_body
      %s16 = ssub.s32 %s11, 1
      %s17 = ssub.s32 %s11, 2
      %s24 = sadd.s32 1, %s19
      %p25 = scmp.ge.s32.totalorder %s24, 1
      %s26 = scalar_select %p25, 0, %s24
      %s27 = sadd.s32 1, %s18
      %s28 = scalar_select %p25, %s27, %s18
      %p29 = scmp.ge.s32.totalorder %s28, 2
      %s30 = scalar_select %p29, 0, %s28
      %s31 = ssub.s32 %s18, %s30
      %s32 = ssub.s32 %s19, %s26
      %s33 = sor.u32 %s31, %s32
      %p34 = scmp.eq.s32.totalorder %s33, 0
      %s36 = sadd.s32 %s35, 1
      %s37 = scalar_select %p34, %s35, %s36
      %p40 = pneg %p34
      %p41 = scmp.eq.s32.totalorder %s11, 1
      %p42 = por %p40, %p41
      %p43 = scmp.ne.s32.totalorder %s35, %s38
      %p44 = scmp.eq.s32.totalorder %s11, 0
      %p45 = por %p43, %p44
      %p46 = scmp.ne.s32.totalorder %s35, %s38
      %p47 = scmp.eq.s32.totalorder %s16, 1
      %p48 = por %p46, %p47
      %p49 = scmp.ne.s32.totalorder %s38, %s39
      %p50 = scmp.eq.s32.totalorder %s16, 0
      %p51 = por %p49, %p50
      %p52 = scmp.ne.s32.totalorder %s38, %s39
      %p53 = scmp.eq.s32.totalorder %s17, 1
      %p54 = por %p52, %p53
      %p56 = scmp.ne.s32.totalorder %s39, %s55
      %p57 = scmp.eq.s32.totalorder %s17, 0
      %p58 = por %p56, %p57
      %s60 = sadd.s32 %s59, 1
      %p63 = scmp.eq.s32.totalorder %s11, 1
      %p64 = scmp.ne.s32.totalorder %s59, %s61
      %p65 = scmp.eq.s32.totalorder %s11, 0
      %p66 = por %p64, %p65
      %p67 = scmp.ne.s32.totalorder %s59, %s61
      %p68 = scmp.eq.s32.totalorder %s16, 1
      %p69 = por %p67, %p68
      %p70 = scmp.ne.s32.totalorder %s61, %s62
      %p71 = scmp.eq.s32.totalorder %s16, 0
      %p72 = por %p70, %p71
      %p73 = scmp.ne.s32.totalorder %s61, %s62
      %p74 = scmp.eq.s32.totalorder %s17, 1
      %p75 = por %p73, %p74
      %p77 = scmp.ne.s32.totalorder %s62, %s76
      %p78 = scmp.eq.s32.totalorder %s17, 0
      %p79 = por %p77, %p78
      %s80 = ssub.s32 %s18, %s30
      %s81 = ssub.s32 %s19, %s26
      %s82 = sor.u32 %s80, %s81
      %p83 = scmp.eq.s32.totalorder %s82, 0
      %s85 = sadd.s32 %s84, 1
      %s86 = scalar_select %p83, %s84, %s85
      %p89 = pneg %p83
      %p90 = scmp.eq.s32.totalorder %s11, 1
      %p91 = por %p89, %p90
      %p92 = scmp.ne.s32.totalorder %s84, %s87
      %p93 = scmp.eq.s32.totalorder %s11, 0
      %p94 = por %p92, %p93
      %p95 = scmp.ne.s32.totalorder %s84, %s87
      %p96 = scmp.eq.s32.totalorder %s16, 1
      %p97 = por %p95, %p96
      %p98 = scmp.ne.s32.totalorder %s87, %s88
      %p99 = scmp.eq.s32.totalorder %s16, 0
      %p100 = por %p98, %p99
      %p101 = scmp.ne.s32.totalorder %s87, %s88
      %p102 = scmp.eq.s32.totalorder %s17, 1
      %p103 = por %p101, %p102
      %p105 = scmp.ne.s32.totalorder %s88, %s104
      %p106 = scmp.eq.s32.totalorder %s17, 0
      %p107 = por %p105, %p106
      %p108 = scmp.le.s32.totalorder 1, %s11
      %p109 = scmp.lt.s32.totalorder %s11, 3
      %p110 = pnand %p108, %p109
      %p111 = pneg %p110
      // Predicated region
      $region9: #{tpu_custom_call.1} parent=5 // pred_check
        _
      $region10: #{tpu_custom_call.1} parent=5 // pred_check_branch
        %113 = sbr.rel (%p110) target = $region12
      $region11: #{tpu_custom_call.1} parent=5 // pred_region
        %s114 = ssub.s32 %s11, 1
        // Predicated region
        $region13: #{tpu_custom_call.1} parent=11 // pred_check
          %p115 = pneg %p72
        $region14: #{tpu_custom_call.1} parent=11 // pred_check_branch
          %117 = sbr.rel (%p115) target = $region16
        $region15: #{tpu_custom_call.1} parent=11 // pred_region
          _
        $region16: #{tpu_custom_call.1} parent=11 // pred_fallthru
          _
      $region12: #{tpu_custom_call.1} parent=5 // pred_fallthru
        _
      %p118 = scmp.lt.s32.totalorder %s11, 2
      // Predicated region
      $region17: #{tpu_custom_call.1} parent=5 // pred_check
        %p119 = pneg %p118
      $region18: #{tpu_custom_call.1} parent=5 // pred_check_branch
        %121 = sbr.rel (%p119) target = $region20
      $region19: #{tpu_custom_call.1} parent=5 // pred_region
        // Predicated region
        $region21: #{tpu_custom_call.1} parent=19 // pred_check
          %p122 = pneg %p45
        $region22: #{tpu_custom_call.1} parent=19 // pred_check_branch
          %124 = sbr.rel (%p122) target = $region24
        $region23: #{tpu_custom_call.1} parent=19 // pred_region
          %p125 = scmp.lt.s32.totalorder %s18, 1
          %s126 = scalar_select %p125, %s18, 1
          %p127 = scmp.lt.s32.totalorder %s19, 0
          %s128 = scalar_select %p127, %s19, 0
          %s129 = sadd.s32 %s128, %s126
          %s130 = smul.addr %s129, 8
          %s131 = scalar_lea.vmem %s0, %s130
        $region24: #{tpu_custom_call.1} parent=19 // pred_fallthru
          _
      $region20: #{tpu_custom_call.1} parent=5 // pred_fallthru
        _
      %p132 = scmp.le.s32.totalorder 1, %s11
      %p133 = scmp.lt.s32.totalorder %s11, 3
      %p134 = pnand %p132, %p133
      %p135 = pneg %p134
      // Predicated region
      $region25: #{tpu_custom_call.1} parent=5 // pred_check
        _
      $region26: #{tpu_custom_call.1} parent=5 // pred_check_branch
        %137 = sbr.rel (%p134) target = $region28
      $region27: #{tpu_custom_call.1} parent=5 // pred_region
        %s138 = ssub.s32 %s11, 1
        %p139 = scmp.lt.s32.totalorder %s20, 1
        %s140 = scalar_select %p139, %s20, 1
        %p141 = scmp.lt.s32.totalorder %s21, 0
        %s142 = scalar_select %p141, %s21, 0
        %s143 = sadd.s32 %s142, %s140
        %s144 = smul.addr %s143, 8
        %s145 = scalar_lea.vmem %s0, %s144
        %p146 = pneg %p51
        %p147 = pneg %p48
        %p148 = pneg %p72
        %p149 = pneg %p69
        %p150 = pneg %p100
        %p151 = pneg %p97
        %s152 = sand.u32 %s87, 1
        %s153 = scalar_lea.sflag [#allocation3], %s152
        %s154 = sand.u32 %s87, 1
        %s155 = smul.addr %s154, 8
        %s156 = scalar_lea.vmem [#allocation2], %s155
        %p157 = scmp.lt.s32.totalorder %s20, 1
        %s158 = scalar_select %p157, %s20, 1
        %p159 = scmp.lt.s32.totalorder %s21, 0
        %s160 = scalar_select %p159, %s21, 0
        %s161 = sadd.s32 %s160, %s158
        %s162 = smul.addr %s161, 8
        %s163 = scalar_lea.vmem %s0, %s162
        %v165 = vld [vmem:[%s163] sm:$0xff]
        %v166 = vlaneseq
        %v167 = vand.u32 %v166, 127
        %168 = vset.pattern.permute.xlu0 0
        %169 = vperm.xlu0 %168, %v165
        %v170 = vpop.permute.xlu0 %169
        %vm171 = vcmp.eq.s32.totalorder %v167, %v170
        %v172 = vsel %vm171, 1, 0
        %v173 = vcvt.s32.f32 %v172
        %v174 = vpack.c.bf16 %v173, %v173
        %v175 = vld [vmem:[%s1] sm:$0xf]
        %v176 = vld [vmem:[%s1 + $0x4] sm:$0xf]
        %v177 = vld [vmem:[%s1 + $0x8] sm:$0xf]
        %v178 = vld [vmem:[%s1 + $0xc] sm:$0xf]
        %v179 = vld [vmem:[%s1 + $0x10] sm:$0xf]
        %v180 = vld [vmem:[%s1 + $0x14] sm:$0xf]
        %v181 = vld [vmem:[%s1 + $0x18] sm:$0xf]
        %v182 = vld [vmem:[%s1 + $0x1c] sm:$0xf]
        %v183 = vld [vmem:[%s1 + $0x20] sm:$0xf]
        %v184 = vld [vmem:[%s1 + $0x24] sm:$0xf]
        %v185 = vld [vmem:[%s1 + $0x28] sm:$0xf]
        %v186 = vld [vmem:[%s1 + $0x2c] sm:$0xf]
        %v187 = vld [vmem:[%s1 + $0x30] sm:$0xf]
        %v188 = vld [vmem:[%s1 + $0x34] sm:$0xf]
        %v189 = vld [vmem:[%s1 + $0x38] sm:$0xf]
        %v190 = vld [vmem:[%s1 + $0x3c] sm:$0xf]
        %v191 = vld [vmem:[%s1 + $0x40] sm:$0xf]
        %v192 = vld [vmem:[%s1 + $0x44] sm:$0xf]
        %v193 = vld [vmem:[%s1 + $0x48] sm:$0xf]
        %v194 = vld [vmem:[%s1 + $0x4c] sm:$0xf]
        %v195 = vld [vmem:[%s1 + $0x50] sm:$0xf]
        %v196 = vld [vmem:[%s1 + $0x54] sm:$0xf]
        %v197 = vld [vmem:[%s1 + $0x58] sm:$0xf]
        %v198 = vld [vmem:[%s1 + $0x5c] sm:$0xf]
        %v199 = vld [vmem:[%s1 + $0x60] sm:$0xf]
        %v200 = vld [vmem:[%s1 + $0x64] sm:$0xf]
        %v201 = vld [vmem:[%s1 + $0x68] sm:$0xf]
        %v202 = vld [vmem:[%s1 + $0x6c] sm:$0xf]
        %v203 = vld [vmem:[%s1 + $0x70] sm:$0xf]
        %v204 = vld [vmem:[%s1 + $0x74] sm:$0xf]
        %v205 = vld [vmem:[%s1 + $0x78] sm:$0xf]
        %v206 = vld [vmem:[%s1 + $0x7c] sm:$0xf]
        %207 = vset.pattern.permute.xlu0 1
        %208 = vperm.xlu0 %207, %v165
        %v209 = vpop.permute.xlu0 %208
        %vm210 = vcmp.eq.s32.totalorder %v167, %v209
        %v211 = vsel %vm210, 1, 0
        %v212 = vcvt.s32.f32 %v211
        %v213 = vpack.c.bf16 %v212, %v212
        %s214 = scalar_lea.vmem %s1, 128
        %v215 = vld [vmem:[%s214] sm:$0xf]
        %v216 = vld [vmem:[%s214 + $0x4] sm:$0xf]
        %v217 = vld [vmem:[%s214 + $0x8] sm:$0xf]
        %v218 = vld [vmem:[%s214 + $0xc] sm:$0xf]
        %v219 = vld [vmem:[%s214 + $0x10] sm:$0xf]
        %v220 = vld [vmem:[%s214 + $0x14] sm:$0xf]
        %v221 = vld [vmem:[%s214 + $0x18] sm:$0xf]
        %v222 = vld [vmem:[%s214 + $0x1c] sm:$0xf]
        %v223 = vld [vmem:[%s214 + $0x20] sm:$0xf]
        %v224 = vld [vmem:[%s214 + $0x24] sm:$0xf]
        %v225 = vld [vmem:[%s214 + $0x28] sm:$0xf]
        %v226 = vld [vmem:[%s214 + $0x2c] sm:$0xf]
        %v227 = vld [vmem:[%s214 + $0x30] sm:$0xf]
        %v228 = vld [vmem:[%s214 + $0x34] sm:$0xf]
        %v229 = vld [vmem:[%s214 + $0x38] sm:$0xf]
        %v230 = vld [vmem:[%s214 + $0x3c] sm:$0xf]
        %v231 = vld [vmem:[%s214 + $0x40] sm:$0xf]
        %v232 = vld [vmem:[%s214 + $0x44] sm:$0xf]
        %v233 = vld [vmem:[%s214 + $0x48] sm:$0xf]
        %v234 = vld [vmem:[%s214 + $0x4c] sm:$0xf]
        %v235 = vld [vmem:[%s214 + $0x50] sm:$0xf]
        %v236 = vld [vmem:[%s214 + $0x54] sm:$0xf]
        %v237 = vld [vmem:[%s214 + $0x58] sm:$0xf]
        %v238 = vld [vmem:[%s214 + $0x5c] sm:$0xf]
        %v239 = vld [vmem:[%s214 + $0x60] sm:$0xf]
        %v240 = vld [vmem:[%s214 + $0x64] sm:$0xf]
        %v241 = vld [vmem:[%s214 + $0x68] sm:$0xf]
        %v242 = vld [vmem:[%s214 + $0x6c] sm:$0xf]
        %v243 = vld [vmem:[%s214 + $0x70] sm:$0xf]
        %v244 = vld [vmem:[%s214 + $0x74] sm:$0xf]
        %v245 = vld [vmem:[%s214 + $0x78] sm:$0xf]
        %v246 = vld [vmem:[%s214 + $0x7c] sm:$0xf]
        %v279 = vunpack.c.l.b16 %v215
        %v280 = vunpack.c.l.b16 %v216
        %v281 = vunpack.c.l.b16 %v217
        %v282 = vunpack.c.l.b16 %v218
        %v283 = vunpack.c.l.b16 %v219
        %v284 = vunpack.c.l.b16 %v220
        %v285 = vunpack.c.l.b16 %v221
        %v286 = vunpack.c.l.b16 %v222
        %v287 = vunpack.c.l.b16 %v223
        %v288 = vunpack.c.l.b16 %v224
        %v289 = vunpack.c.l.b16 %v225
        %v290 = vunpack.c.l.b16 %v226
        %v291 = vunpack.c.l.b16 %v227
        %v292 = vunpack.c.l.b16 %v228
        %v293 = vunpack.c.l.b16 %v229
        %v294 = vunpack.c.l.b16 %v230
        %v295 = vunpack.c.l.b16 %v231
        %v296 = vunpack.c.l.b16 %v232
        %v297 = vunpack.c.l.b16 %v233
        %v298 = vunpack.c.l.b16 %v234
        %v299 = vunpack.c.l.b16 %v235
        %v300 = vunpack.c.l.b16 %v236
        %v301 = vunpack.c.l.b16 %v237
        %v302 = vunpack.c.l.b16 %v238
        %v303 = vunpack.c.l.b16 %v239
        %v304 = vunpack.c.l.b16 %v240
        %v305 = vunpack.c.l.b16 %v241
        %v306 = vunpack.c.l.b16 %v242
        %v307 = vunpack.c.l.b16 %v243
        %v308 = vunpack.c.l.b16 %v244
        %v309 = vunpack.c.l.b16 %v245
        %v310 = vunpack.c.l.b16 %v246
        %v311 = vpack.c.b16 %v280, %v279
        %v312 = vpack.c.b16 %v282, %v281
        %v313 = vpack.c.b16 %v284, %v283
        %v314 = vpack.c.b16 %v286, %v285
        %v315 = vpack.c.b16 %v288, %v287
        %v316 = vpack.c.b16 %v290, %v289
        %v317 = vpack.c.b16 %v292, %v291
        %v318 = vpack.c.b16 %v294, %v293
        %v319 = vpack.c.b16 %v296, %v295
        %v320 = vpack.c.b16 %v298, %v297
        %v321 = vpack.c.b16 %v300, %v299
        %v322 = vpack.c.b16 %v302, %v301
        %v323 = vpack.c.b16 %v304, %v303
        %v324 = vpack.c.b16 %v306, %v305
        %v325 = vpack.c.b16 %v308, %v307
        %v326 = vpack.c.b16 %v310, %v309
        %343 = vmatprep.subr.bf16.mxu0 0
        %344 = vmatpush1.bf16.msra.mxu0 %v311
        %345 = vmatprep.subr.bf16.mxu0 0
        %346 = vmatpush1.bf16.msra.mxu0 %v312
        %347 = vmatprep.subr.bf16.mxu0 0
        %348 = vmatpush1.bf16.msra.mxu0 %v313
        %349 = vmatprep.subr.bf16.mxu0 0
        %350 = vmatpush1.bf16.msra.mxu0 %v314
        %351 = vmatprep.subr.bf16.mxu0 0
        %352 = vmatpush1.bf16.msra.mxu0 %v315
        %353 = vmatprep.subr.bf16.mxu0 0
        %354 = vmatpush1.bf16.msra.mxu0 %v316
        %355 = vmatprep.subr.bf16.mxu0 0
        %356 = vmatpush1.bf16.msra.mxu0 %v317
        %357 = vmatprep.subr.bf16.mxu0 0
        %358 = vmatpush1.bf16.msra.mxu0 %v318
        %359 = vmatprep.subr.bf16.mxu0 0
        %360 = vmatpush1.bf16.msra.mxu0 %v319
        %361 = vmatprep.subr.bf16.mxu0 0
        %362 = vmatpush1.bf16.msra.mxu0 %v320
        %363 = vmatprep.subr.bf16.mxu0 0
        %364 = vmatpush1.bf16.msra.mxu0 %v321
        %365 = vmatprep.subr.bf16.mxu0 0
        %366 = vmatpush1.bf16.msra.mxu0 %v322
        %367 = vmatprep.subr.bf16.mxu0 0
        %368 = vmatpush1.bf16.msra.mxu0 %v323
        %369 = vmatprep.subr.bf16.mxu0 0
        %370 = vmatpush1.bf16.msra.mxu0 %v324
        %371 = vmatprep.subr.bf16.mxu0 0
        %372 = vmatpush1.bf16.msra.mxu0 %v325
        %373 = vmatprep.subr.bf16.mxu0 0
        %374 = vmatpush1.bf16.msra.mxu0 %v326
        %375 = vmatprep.mubr.bf16.mxu0 %v213
        %376 = vmatmul.mubr.bf16.gmra.mrb[0].mxu0 %v213
        %v377 = vpop.f32.mrb[0].mxu0
        %v378 = vadd.f32 0.0, %v377
        %v379 = vpop.f32.mrb[0].mxu0
        %v380 = vpop.f32.mrb[0].mxu0
        %v381 = vpop.f32.mrb[0].mxu0
        %382 = vdwg.mxu0
        %v415 = vunpack.c.l.b16 %v175
        %v416 = vunpack.c.l.b16 %v176
        %v417 = vunpack.c.l.b16 %v177
        %v418 = vunpack.c.l.b16 %v178
        %v419 = vunpack.c.l.b16 %v179
        %v420 = vunpack.c.l.b16 %v180
        %v421 = vunpack.c.l.b16 %v181
        %v422 = vunpack.c.l.b16 %v182
        %v423 = vunpack.c.l.b16 %v183
        %v424 = vunpack.c.l.b16 %v184
        %v425 = vunpack.c.l.b16 %v185
        %v426 = vunpack.c.l.b16 %v186
        %v427 = vunpack.c.l.b16 %v187
        %v428 = vunpack.c.l.b16 %v188
        %v429 = vunpack.c.l.b16 %v189
        %v430 = vunpack.c.l.b16 %v190
        %v431 = vunpack.c.l.b16 %v191
        %v432 = vunpack.c.l.b16 %v192
        %v433 = vunpack.c.l.b16 %v193
        %v434 = vunpack.c.l.b16 %v194
        %v435 = vunpack.c.l.b16 %v195
        %v436 = vunpack.c.l.b16 %v196
        %v437 = vunpack.c.l.b16 %v197
        %v438 = vunpack.c.l.b16 %v198
        %v439 = vunpack.c.l.b16 %v199
        %v440 = vunpack.c.l.b16 %v200
        %v441 = vunpack.c.l.b16 %v201
        %v442 = vunpack.c.l.b16 %v202
        %v443 = vunpack.c.l.b16 %v203
        %v444 = vunpack.c.l.b16 %v204
        %v445 = vunpack.c.l.b16 %v205
        %v446 = vunpack.c.l.b16 %v206
        %v447 = vpack.c.b16 %v416, %v415
        %v448 = vpack.c.b16 %v418, %v417
        %v449 = vpack.c.b16 %v420, %v419
        %v450 = vpack.c.b16 %v422, %v421
        %v451 = vpack.c.b16 %v424, %v423
        %v452 = vpack.c.b16 %v426, %v425
        %v453 = vpack.c.b16 %v428, %v427
        %v454 = vpack.c.b16 %v430, %v429
        %v455 = vpack.c.b16 %v432, %v431
        %v456 = vpack.c.b16 %v434, %v433
        %v457 = vpack.c.b16 %v436, %v435
        %v458 = vpack.c.b16 %v438, %v437
        %v459 = vpack.c.b16 %v440, %v439
        %v460 = vpack.c.b16 %v442, %v441
        %v461 = vpack.c.b16 %v444, %v443
        %v462 = vpack.c.b16 %v446, %v445
        %479 = vmatprep.subr.bf16.mxu0 0
        %480 = vmatpush1.bf16.msra.mxu0 %v447
        %481 = vmatprep.subr.bf16.mxu0 0
        %482 = vmatpush1.bf16.msra.mxu0 %v448
        %483 = vmatprep.subr.bf16.mxu0 0
        %484 = vmatpush1.bf16.msra.mxu0 %v449
        %485 = vmatprep.subr.bf16.mxu0 0
        %486 = vmatpush1.bf16.msra.mxu0 %v450
        %487 = vmatprep.subr.bf16.mxu0 0
        %488 = vmatpush1.bf16.msra.mxu0 %v451
        %489 = vmatprep.subr.bf16.mxu0 0
        %490 = vmatpush1.bf16.msra.mxu0 %v452
        %491 = vmatprep.subr.bf16.mxu0 0
        %492 = vmatpush1.bf16.msra.mxu0 %v453
        %493 = vmatprep.subr.bf16.mxu0 0
        %494 = vmatpush1.bf16.msra.mxu0 %v454
        %495 = vmatprep.subr.bf16.mxu0 0
        %496 = vmatpush1.bf16.msra.mxu0 %v455
        %497 = vmatprep.subr.bf16.mxu0 0
        %498 = vmatpush1.bf16.msra.mxu0 %v456
        %499 = vmatprep.subr.bf16.mxu0 0
        %500 = vmatpush1.bf16.msra.mxu0 %v457
        %501 = vmatprep.subr.bf16.mxu0 0
        %502 = vmatpush1.bf16.msra.mxu0 %v458
        %503 = vmatprep.subr.bf16.mxu0 0
        %504 = vmatpush1.bf16.msra.mxu0 %v459
        %505 = vmatprep.subr.bf16.mxu0 0
        %506 = vmatpush1.bf16.msra.mxu0 %v460
        %507 = vmatprep.subr.bf16.mxu0 0
        %508 = vmatpush1.bf16.msra.mxu0 %v461
        %509 = vmatprep.subr.bf16.mxu0 0
        %510 = vmatpush1.bf16.msra.mxu0 %v462
        %511 = vmatprep.mubr.bf16.mxu0 %v174
        %512 = vmatmul.mubr.bf16.gmra.mrb[0].mxu0 %v174
        %v513 = vpop.f32.mrb[0].mxu0
        %v514 = vadd.f32 %v378, %v513
        %v515 = vpop.f32.mrb[0].mxu0
        %v516 = vpop.f32.mrb[0].mxu0
        %v517 = vpop.f32.mrb[0].mxu0
        %518 = vdwg.mxu0
        %519 = vset.pattern.permute.xlu0 2
        %520 = vperm.xlu0 %519, %v165
        %v521 = vpop.permute.xlu0 %520
        %vm522 = vcmp.eq.s32.totalorder %v167, %v521
        %v523 = vsel %vm522, 1, 0
        %v524 = vcvt.s32.f32 %v523
        %v525 = vpack.c.bf16 %v524, %v524
        %s526 = scalar_lea.vmem %s1, 256
        %v527 = vld [vmem:[%s526] sm:$0xf]
        %v528 = vld [vmem:[%s526 + $0x4] sm:$0xf]
        %v529 = vld [vmem:[%s526 + $0x8] sm:$0xf]
        %v530 = vld [vmem:[%s526 + $0xc] sm:$0xf]
        %v531 = vld [vmem:[%s526 + $0x10] sm:$0xf]
        %v532 = vld [vmem:[%s526 + $0x14] sm:$0xf]
        %v533 = vld [vmem:[%s526 + $0x18] sm:$0xf]
        %v534 = vld [vmem:[%s526 + $0x1c] sm:$0xf]
        %v535 = vld [vmem:[%s526 + $0x20] sm:$0xf]
        %v536 = vld [vmem:[%s526 + $0x24] sm:$0xf]
        %v537 = vld [vmem:[%s526 + $0x28] sm:$0xf]
        %v538 = vld [vmem:[%s526 + $0x2c] sm:$0xf]
        %v539 = vld [vmem:[%s526 + $0x30] sm:$0xf]
        %v540 = vld [vmem:[%s526 + $0x34] sm:$0xf]
        %v541 = vld [vmem:[%s526 + $0x38] sm:$0xf]
        %v542 = vld [vmem:[%s526 + $0x3c] sm:$0xf]
        %v543 = vld [vmem:[%s526 + $0x40] sm:$0xf]
        %v544 = vld [vmem:[%s526 + $0x44] sm:$0xf]
        %v545 = vld [vmem:[%s526 + $0x48] sm:$0xf]
        %v546 = vld [vmem:[%s526 + $0x4c] sm:$0xf]
        %v547 = vld [vmem:[%s526 + $0x50] sm:$0xf]
        %v548 = vld [vmem:[%s526 + $0x54] sm:$0xf]
        %v549 = vld [vmem:[%s526 + $0x58] sm:$0xf]
        %v550 = vld [vmem:[%s526 + $0x5c] sm:$0xf]
        %v551 = vld [vmem:[%s526 + $0x60] sm:$0xf]
        %v552 = vld [vmem:[%s526 + $0x64] sm:$0xf]
        %v553 = vld [vmem:[%s526 + $0x68] sm:$0xf]
        %v554 = vld [vmem:[%s526 + $0x6c] sm:$0xf]
        %v555 = vld [vmem:[%s526 + $0x70] sm:$0xf]
        %v556 = vld [vmem:[%s526 + $0x74] sm:$0xf]
        %v557 = vld [vmem:[%s526 + $0x78] sm:$0xf]
        %v558 = vld [vmem:[%s526 + $0x7c] sm:$0xf]
        %v591 = vunpack.c.l.b16 %v527
        %v592 = vunpack.c.l.b16 %v528
        %v593 = vunpack.c.l.b16 %v529
        %v594 = vunpack.c.l.b16 %v530
        %v595 = vunpack.c.l.b16 %v531
        %v596 = vunpack.c.l.b16 %v532
        %v597 = vunpack.c.l.b16 %v533
        %v598 = vunpack.c.l.b16 %v534
        %v599 = vunpack.c.l.b16 %v535
        %v600 = vunpack.c.l.b16 %v536
        %v601 = vunpack.c.l.b16 %v537
        %v602 = vunpack.c.l.b16 %v538
        %v603 = vunpack.c.l.b16 %v539
        %v604 = vunpack.c.l.b16 %v540
        %v605 = vunpack.c.l.b16 %v541
        %v606 = vunpack.c.l.b16 %v542
        %v607 = vunpack.c.l.b16 %v543
        %v608 = vunpack.c.l.b16 %v544
        %v609 = vunpack.c.l.b16 %v545
        %v610 = vunpack.c.l.b16 %v546
        %v611 = vunpack.c.l.b16 %v547
        %v612 = vunpack.c.l.b16 %v548
        %v613 = vunpack.c.l.b16 %v549
        %v614 = vunpack.c.l.b16 %v550
        %v615 = vunpack.c.l.b16 %v551
        %v616 = vunpack.c.l.b16 %v552
        %v617 = vunpack.c.l.b16 %v553
        %v618 = vunpack.c.l.b16 %v554
        %v619 = vunpack.c.l.b16 %v555
        %v620 = vunpack.c.l.b16 %v556
        %v621 = vunpack.c.l.b16 %v557
        %v622 = vunpack.c.l.b16 %v558
        %v623 = vpack.c.b16 %v592, %v591
        %v624 = vpack.c.b16 %v594, %v593
        %v625 = vpack.c.b16 %v596, %v595
        %v626 = vpack.c.b16 %v598, %v597
        %v627 = vpack.c.b16 %v600, %v599
        %v628 = vpack.c.b16 %v602, %v601
        %v629 = vpack.c.b16 %v604, %v603
        %v630 = vpack.c.b16 %v606, %v605
        %v631 = vpack.c.b16 %v608, %v607
        %v632 = vpack.c.b16 %v610, %v609
        %v633 = vpack.c.b16 %v612, %v611
        %v634 = vpack.c.b16 %v614, %v613
        %v635 = vpack.c.b16 %v616, %v615
        %v636 = vpack.c.b16 %v618, %v617
        %v637 = vpack.c.b16 %v620, %v619
        %v638 = vpack.c.b16 %v622, %v621
        %655 = vmatprep.subr.bf16.mxu0 0
        %656 = vmatpush1.bf16.msra.mxu0 %v623
        %657 = vmatprep.subr.bf16.mxu0 0
        %658 = vmatpush1.bf16.msra.mxu0 %v624
        %659 = vmatprep.subr.bf16.mxu0 0
        %660 = vmatpush1.bf16.msra.mxu0 %v625
        %661 = vmatprep.subr.bf16.mxu0 0
        %662 = vmatpush1.bf16.msra.mxu0 %v626
        %663 = vmatprep.subr.bf16.mxu0 0
        %664 = vmatpush1.bf16.msra.mxu0 %v627
        %665 = vmatprep.subr.bf16.mxu0 0
        %666 = vmatpush1.bf16.msra.mxu0 %v628
        %667 = vmatprep.subr.bf16.mxu0 0
        %668 = vmatpush1.bf16.msra.mxu0 %v629
        %669 = vmatprep.subr.bf16.mxu0 0
        %670 = vmatpush1.bf16.msra.mxu0 %v630
        %671 = vmatprep.subr.bf16.mxu0 0
        %672 = vmatpush1.bf16.msra.mxu0 %v631
        %673 = vmatprep.subr.bf16.mxu0 0
        %674 = vmatpush1.bf16.msra.mxu0 %v632
        %675 = vmatprep.subr.bf16.mxu0 0
        %676 = vmatpush1.bf16.msra.mxu0 %v633
        %677 = vmatprep.subr.bf16.mxu0 0
        %678 = vmatpush1.bf16.msra.mxu0 %v634
        %679 = vmatprep.subr.bf16.mxu0 0
        %680 = vmatpush1.bf16.msra.mxu0 %v635
        %681 = vmatprep.subr.bf16.mxu0 0
        %682 = vmatpush1.bf16.msra.mxu0 %v636
        %683 = vmatprep.subr.bf16.mxu0 0
        %684 = vmatpush1.bf16.msra.mxu0 %v637
        %685 = vmatprep.subr.bf16.mxu0 0
        %686 = vmatpush1.bf16.msra.mxu0 %v638
        %687 = vmatprep.mubr.bf16.mxu0 %v525
        %688 = vmatmul.mubr.bf16.gmra.mrb[0].mxu0 %v525
        %v689 = vpop.f32.mrb[0].mxu0
        %v690 = vadd.f32 0.0, %v689
        %v691 = vpop.f32.mrb[0].mxu0
        %v692 = vpop.f32.mrb[0].mxu0
        %v693 = vpop.f32.mrb[0].mxu0
        %694 = vdwg.mxu0
        %v695 = vadd.f32 %v514, %v690
        %696 = vset.pattern.permute.xlu0 3
        %697 = vperm.xlu0 %696, %v165
        %v698 = vpop.permute.xlu0 %697
        %vm699 = vcmp.eq.s32.totalorder %v167, %v698
        %v700 = vsel %vm699, 1, 0
        %v701 = vcvt.s32.f32 %v700
        %v702 = vpack.c.bf16 %v701, %v701
        %s703 = scalar_lea.vmem %s1, 384
        %v704 = vld [vmem:[%s703] sm:$0xf]
        %v705 = vld [vmem:[%s703 + $0x4] sm:$0xf]
        %v706 = vld [vmem:[%s703 + $0x8] sm:$0xf]
        %v707 = vld [vmem:[%s703 + $0xc] sm:$0xf]
        %v708 = vld [vmem:[%s703 + $0x10] sm:$0xf]
        %v709 = vld [vmem:[%s703 + $0x14] sm:$0xf]
        %v710 = vld [vmem:[%s703 + $0x18] sm:$0xf]
        %v711 = vld [vmem:[%s703 + $0x1c] sm:$0xf]
        %v712 = vld [vmem:[%s703 + $0x20] sm:$0xf]
        %v713 = vld [vmem:[%s703 + $0x24] sm:$0xf]
        %v714 = vld [vmem:[%s703 + $0x28] sm:$0xf]
        %v715 = vld [vmem:[%s703 + $0x2c] sm:$0xf]
        %v716 = vld [vmem:[%s703 + $0x30] sm:$0xf]
        %v717 = vld [vmem:[%s703 + $0x34] sm:$0xf]
        %v718 = vld [vmem:[%s703 + $0x38] sm:$0xf]
        %v719 = vld [vmem:[%s703 + $0x3c] sm:$0xf]
        %v720 = vld [vmem:[%s703 + $0x40] sm:$0xf]
        %v721 = vld [vmem:[%s703 + $0x44] sm:$0xf]
        %v722 = vld [vmem:[%s703 + $0x48] sm:$0xf]
        %v723 = vld [vmem:[%s703 + $0x4c] sm:$0xf]
        %v724 = vld [vmem:[%s703 + $0x50] sm:$0xf]
        %v725 = vld [vmem:[%s703 + $0x54] sm:$0xf]
        %v726 = vld [vmem:[%s703 + $0x58] sm:$0xf]
        %v727 = vld [vmem:[%s703 + $0x5c] sm:$0xf]
        %v728 = vld [vmem:[%s703 + $0x60] sm:$0xf]
        %v729 = vld [vmem:[%s703 + $0x64] sm:$0xf]
        %v730 = vld [vmem:[%s703 + $0x68] sm:$0xf]
        %v731 = vld [vmem:[%s703 + $0x6c] sm:$0xf]
        %v732 = vld [vmem:[%s703 + $0x70] sm:$0xf]
        %v733 = vld [vmem:[%s703 + $0x74] sm:$0xf]
        %v734 = vld [vmem:[%s703 + $0x78] sm:$0xf]
        %v735 = vld [vmem:[%s703 + $0x7c] sm:$0xf]
        %v768 = vunpack.c.l.b16 %v704
        %v769 = vunpack.c.l.b16 %v705
        %v770 = vunpack.c.l.b16 %v706
        %v771 = vunpack.c.l.b16 %v707
        %v772 = vunpack.c.l.b16 %v708
        %v773 = vunpack.c.l.b16 %v709
        %v774 = vunpack.c.l.b16 %v710
        %v775 = vunpack.c.l.b16 %v711
        %v776 = vunpack.c.l.b16 %v712
        %v777 = vunpack.c.l.b16 %v713
        %v778 = vunpack.c.l.b16 %v714
        %v779 = vunpack.c.l.b16 %v715
        %v780 = vunpack.c.l.b16 %v716
        %v781 = vunpack.c.l.b16 %v717
        %v782 = vunpack.c.l.b16 %v718
        %v783 = vunpack.c.l.b16 %v719
        %v784 = vunpack.c.l.b16 %v720
        %v785 = vunpack.c.l.b16 %v721
        %v786 = vunpack.c.l.b16 %v722
        %v787 = vunpack.c.l.b16 %v723
        %v788 = vunpack.c.l.b16 %v724
        %v789 = vunpack.c.l.b16 %v725
        %v790 = vunpack.c.l.b16 %v726
        %v791 = vunpack.c.l.b16 %v727
        %v792 = vunpack.c.l.b16 %v728
        %v793 = vunpack.c.l.b16 %v729
        %v794 = vunpack.c.l.b16 %v730
        %v795 = vunpack.c.l.b16 %v731
        %v796 = vunpack.c.l.b16 %v732
        %v797 = vunpack.c.l.b16 %v733
        %v798 = vunpack.c.l.b16 %v734
        %v799 = vunpack.c.l.b16 %v735
        %v800 = vpack.c.b16 %v769, %v768
        %v801 = vpack.c.b16 %v771, %v770
        %v802 = vpack.c.b16 %v773, %v772
        %v803 = vpack.c.b16 %v775, %v774
        %v804 = vpack.c.b16 %v777, %v776
        %v805 = vpack.c.b16 %v779, %v778
        %v806 = vpack.c.b16 %v781, %v780
        %v807 = vpack.c.b16 %v783, %v782
        %v808 = vpack.c.b16 %v785, %v784
        %v809 = vpack.c.b16 %v787, %v786
        %v810 = vpack.c.b16 %v789, %v788
        %v811 = vpack.c.b16 %v791, %v790
        %v812 = vpack.c.b16 %v793, %v792
        %v813 = vpack.c.b16 %v795, %v794
        %v814 = vpack.c.b16 %v797, %v796
        %v815 = vpack.c.b16 %v799, %v798
        %832 = vmatprep.subr.bf16.mxu0 0
        %833 = vmatpush1.bf16.msra.mxu0 %v800
        %834 = vmatprep.subr.bf16.mxu0 0
        %835 = vmatpush1.bf16.msra.mxu0 %v801
        %836 = vmatprep.subr.bf16.mxu0 0
        %837 = vmatpush1.bf16.msra.mxu0 %v802
        %838 = vmatprep.subr.bf16.mxu0 0
        %839 = vmatpush1.bf16.msra.mxu0 %v803
        %840 = vmatprep.subr.bf16.mxu0 0
        %841 = vmatpush1.bf16.msra.mxu0 %v804
        %842 = vmatprep.subr.bf16.mxu0 0
        %843 = vmatpush1.bf16.msra.mxu0 %v805
        %844 = vmatprep.subr.bf16.mxu0 0
        %845 = vmatpush1.bf16.msra.mxu0 %v806
        %846 = vmatprep.subr.bf16.mxu0 0
        %847 = vmatpush1.bf16.msra.mxu0 %v807
        %848 = vmatprep.subr.bf16.mxu0 0
        %849 = vmatpush1.bf16.msra.mxu0 %v808
        %850 = vmatprep.subr.bf16.mxu0 0
        %851 = vmatpush1.bf16.msra.mxu0 %v809
        %852 = vmatprep.subr.bf16.mxu0 0
        %853 = vmatpush1.bf16.msra.mxu0 %v810
        %854 = vmatprep.subr.bf16.mxu0 0
        %855 = vmatpush1.bf16.msra.mxu0 %v811
        %856 = vmatprep.subr.bf16.mxu0 0
        %857 = vmatpush1.bf16.msra.mxu0 %v812
        %858 = vmatprep.subr.bf16.mxu0 0
        %859 = vmatpush1.bf16.msra.mxu0 %v813
        %860 = vmatprep.subr.bf16.mxu0 0
        %861 = vmatpush1.bf16.msra.mxu0 %v814
        %862 = vmatprep.subr.bf16.mxu0 0
        %863 = vmatpush1.bf16.msra.mxu0 %v815
        %864 = vmatprep.mubr.bf16.mxu0 %v702
        %865 = vmatmul.mubr.bf16.gmra.mrb[0].mxu0 %v702
        %v866 = vpop.f32.mrb[0].mxu0
        %v867 = vadd.f32 0.0, %v866
        %v868 = vpop.f32.mrb[0].mxu0
        %v869 = vpop.f32.mrb[0].mxu0
        %v870 = vpop.f32.mrb[0].mxu0
        %871 = vdwg.mxu0
        %v872 = vadd.f32 %v695, %v867
        %vm873 = vcmask 261120
        %874 = vst.msk [vmem:[%s156] sm:$0xff] %vm873, %v872
        %s875 = sand.u32 %s87, 1
        %s876 = scalar_lea.sflag [#allocation3], %s875
        %s877 = sand.u32 %s87, 1
        %s878 = smul.addr %s877, 8
        %s879 = scalar_lea.vmem [#allocation2], %s878
        // Predicated region
        $region29: #{tpu_custom_call.1} parent=27 // pred_check
          %p880 = pneg %p97
        $region30: #{tpu_custom_call.1} parent=27 // pred_check_branch
          %882 = sbr.rel (%p880) target = $region32
        $region31: #{tpu_custom_call.1} parent=27 // pred_region
          %s884 = ssub.s32 128, 128
          %885 = vsyncadd %s876, %s884
          %s886 = sadd.s32 %s21, %s20
          %s887 = smul.addr %s886, 128
          %s888 = scalar_lea.hbm %s2, %s887
          %s890 = sshll.u32 %s879, 4
          %s891 = int_to_ptr.vmem [resolvable:$true] %s890
          %893 = dma.vmem_to_hbm [thread:$0]  %s891, 128, %s888, %s876
        $region32: #{tpu_custom_call.1} parent=27 // pred_fallthru
          _
      $region28: #{tpu_custom_call.1} parent=5 // pred_fallthru
        _
      %p894 = scmp.le.s32.totalorder 2, %s11
      // Predicated region
      $region33: #{tpu_custom_call.1} parent=5 // pred_check
        %p895 = pneg %p894
      $region34: #{tpu_custom_call.1} parent=5 // pred_check_branch
        %897 = sbr.rel (%p895) target = $region36
      $region35: #{tpu_custom_call.1} parent=5 // pred_region
        %s898 = ssub.s32 %s11, 2
        // Predicated region
        $region37: #{tpu_custom_call.1} parent=35 // pred_check
          %p899 = pneg %p103
        $region38: #{tpu_custom_call.1} parent=35 // pred_check_branch
          %901 = sbr.rel (%p899) target = $region40
        $region39: #{tpu_custom_call.1} parent=35 // pred_region
          %s902 = sand.u32 %s88, 1
          %s903 = scalar_lea.sflag [#allocation3], %s902
          %s904 = sand.u32 %s88, 1
          %s905 = smul.addr %s904, 8
          %s906 = scalar_lea.vmem [#allocation2], %s905
          %907 = dma.done %s903, 128
        $region40: #{tpu_custom_call.1} parent=35 // pred_fallthru
          _
      $region36: #{tpu_custom_call.1} parent=5 // pred_fallthru
        _
    $region6: #{tpu_custom_call.1} parent=1 // loop_footer
      %s15 = sadd.s32 1, %s11
    $region7: #{tpu_custom_call.1} parent=1 // loop_footer_branch
      %10 = sbr.rel target = $region3
    $region8: #{tpu_custom_call.1} parent=1 // loop_exit
      _
    %908 = vsyncpa [#allocation3], 1
    %s909 = scalar_lea.sflag [#allocation3], 1
    %910 = vsyncpa %s909, 1

</llo_original>
